<compile_context>
chip_gen: v7x
topology: tpu7x:2x2x1
jax: 0.10.0
libtpu: 0.0.40
codegen_flags: <defaults>
</compile_context>

<pallas_src>
import jax
import jax.numpy as jnp
from jax.experimental import pallas as pl
from jax.experimental.pallas import tpu as pltpu


_VMEM_TILE_BUDGET = 24 * 1024 * 1024   # cap on the double-buffered working set
_VMEM_LIMIT_BYTES = 32 * 1024 * 1024   # scoped-VMEM limit handed to Mosaic


def _round_up(x, m):
    return ((x + m - 1) // m) * m


def _sublane_pack(dtype):
    """Sublane packing factor for a dtype: f32->8, bf16->16, int8/fp8->32."""
    return {4: 8, 2: 16, 1: 32}.get(jnp.dtype(dtype).itemsize, 8)


def _footprint_bytes(tm, tk, tn, x_bytes, w_bytes, out_bytes, multi_k):
    fp = 2 * (tm * tk * x_bytes)        # x tiles, double buffered
    fp += 2 * (tk * tn * w_bytes)       # W tiles, double buffered
    fp += 2 * (2 * tn * 4)              # bias (+ optional scale) rows
    fp += 2 * (tm * tn * out_bytes)     # output tiles, double buffered
    if multi_k:
        fp += tm * tn * 4               # f32 accumulator scratch
    return fp


def _make_logits_kernel(multi_k, quantized):
    """Kernel body.  Ref order: x, W, [scale], bias, out, [acc scratch]."""

    def kernel(*refs):
        if quantized:
            x_ref, w_ref, s_ref, b_ref, o_ref = refs[:5]
            rest = refs[5:]
        else:
            x_ref, w_ref, b_ref, o_ref = refs[:4]
            s_ref = None
            rest = refs[4:]

        def partial_matmul():
            w = w_ref[...]
            if quantized:
                # int8 weight -> MXU operand dtype (bandwidth-saving dequant).
                w = w.astype(x_ref.dtype)
            return jnp.dot(x_ref[...], w, preferred_element_type=jnp.float32)

        def finalize(acc, add_bias):
            if quantized:
                acc = acc * s_ref[...]          # per-column dequant scale
            if add_bias:
                acc = acc + b_ref[...]
            o_ref[...] = acc.astype(o_ref.dtype)

        if not multi_k:
            # Whole reduction in one tile: no f32 scratch, single store.
            finalize(partial_matmul(), add_bias=True)
            return

        acc_ref = rest[0]
        k = pl.program_id(2)

        @pl.when(k == 0)
        def _init():
            if quantized:
                acc_ref[...] = jnp.zeros_like(acc_ref)
            else:
                # Fold the bias into the accumulator init (no epilogue add).
                acc_ref[...] = jnp.broadcast_to(b_ref[...], acc_ref.shape)

        acc_ref[...] += partial_matmul()

        @pl.when(k == pl.num_programs(2) - 1)
        def _fin():
            finalize(acc_ref[...], add_bias=quantized)

    return kernel


def prepare_logits_params(w, b, *, mxu_dtype=jnp.bfloat16, weight_quant="none"):
    """Pre-cast / pre-pad the logits-head parameters ONCE (outside the hot path).

    w: [H, C]   b: [C]
    mxu_dtype:    operand dtype fed to the MXU (bf16 default; accumulation f32).
    weight_quant: "none" (W stored in mxu_dtype) or "int8" (W stored int8 with
                  per-column scales applied in the kernel epilogue).
    """
    H, C = w.shape
    assert b.shape == (C,)
    Hp = _round_up(H, 128)
    Cp = _round_up(C, 128)

    scale = None
    if weight_quant == "int8":
        wf = w.astype(jnp.float32)
        amax = jnp.max(jnp.abs(wf), axis=0)
        col_scale = jnp.where(amax > 0, amax / 127.0, 1.0)
        wp = jnp.clip(jnp.round(wf / col_scale), -127, 127).astype(jnp.int8)
        scale = col_scale.astype(jnp.float32)
    elif weight_quant == "none":
        wp = w.astype(mxu_dtype) if mxu_dtype is not None else w
    else:
        raise ValueError(f"unsupported weight_quant: {weight_quant}")

    if (Hp, Cp) != (H, C):                       # pad only when necessary
        wp = jnp.pad(wp, ((0, Hp - H), (0, Cp - C)))

    bp = b.astype(jnp.float32)
    if Cp != C:
        bp = jnp.pad(bp, (0, Cp - C))
    bp = bp.reshape(1, Cp)

    if scale is not None:
        if Cp != C:
            scale = jnp.pad(scale, (0, Cp - C))
        scale = scale.reshape(1, Cp)

    return dict(w=wp, b=bp, scale=scale, H=H, C=C,
                mxu_dtype=mxu_dtype, weight_quant=weight_quant)


def model_logits(x, params, *, out_dtype=jnp.float32):
    """logits = x @ W + b, with W/b pre-prepared by prepare_logits_params."""
    wp, bp, sp = params["w"], params["b"], params["scale"]
    H, C = params["H"], params["C"]
    mxu_dtype = params["mxu_dtype"]
    quantized = params["weight_quant"] == "int8"
    Hp, Cp = wp.shape

    B, Hx = x.shape
    assert Hx == H

    if mxu_dtype is not None and x.dtype != mxu_dtype:
        x = x.astype(mxu_dtype)

    x_bytes = jnp.dtype(x.dtype).itemsize
    w_bytes = jnp.dtype(wp.dtype).itemsize
    out_bytes = jnp.dtype(out_dtype).itemsize

    # ---- batch padding & tm (sublane-pack aware, up to 256 = full MXU) ------
    Bp = _round_up(B, _sublane_pack(x.dtype))
    tm = min(256, Bp)
    Bp = _round_up(Bp, tm)

    # ---- tn / tk selection under the VMEM budget -----------------------------
    tn_cands = [c for c in (2048, 1024, 512, 256, 128)
                if c <= Cp and Cp % c == 0] or [Cp]
    tk_cands = [c for c in (2048, 1024, 512, 256, 128)
                if c <= Hp and Hp % c == 0] or [Hp]
    # A single-K schedule (tk = Hp) keeps x resident (DMA'd once) and drops the
    # f32 scratch; prefer it when the resident x slab is small.
    resident_ok = (Bp == tm) and (Bp * Hp * x_bytes <= 4 * 1024 * 1024)
    if resident_ok:
        tk_cands = [Hp] + [c for c in tk_cands if c != Hp]

    def fits(tk, tn):
        return _footprint_bytes(tm, tk, tn, x_bytes, w_bytes, out_bytes,
                                multi_k=(Hp // tk) > 1) <= _VMEM_TILE_BUDGET

    chosen = None
    if resident_ok:
        # Maximize tk first (x resident), then tn.
        for tk_c in tk_cands:
            for tn_c in tn_cands:
                if fits(tk_c, tn_c):
                    chosen = (tk_c, tn_c)
                    break
            if chosen:
                break
    else:
        # Maximize tn first (cuts x re-streaming & per-step overhead), then tk.
        for tn_c in tn_cands:
            for tk_c in tk_cands:
                if fits(tk_c, tn_c):
                    chosen = (tk_c, tn_c)
                    break
            if chosen:
                break
    if chosen is None:
        chosen = (min(tk_cands), min(tn_cands))
    tk, tn = chosen

    nk = Hp // tk
    multi_k = nk > 1

    # ---- pad activations only when needed ------------------------------------
    if (Bp, Hp) != (B, H):
        x = jnp.pad(x, ((0, Bp - B), (0, Hp - H)))

    kernel = _make_logits_kernel(multi_k, quantized)

    if multi_k:
        grid = (Bp // tm, Cp // tn, nk)
        x_spec = pl.BlockSpec((tm, tk), lambda i, j, k: (i, k))
        w_spec = pl.BlockSpec((tk, tn), lambda i, j, k: (k, j))
        row_spec = pl.BlockSpec((1, tn), lambda i, j, k: (0, j))
        out_spec = pl.BlockSpec((tm, tn), lambda i, j, k: (i, j))
        scratch = [pltpu.VMEM((tm, tn), jnp.float32)]
        semantics = ("parallel", "parallel", "arbitrary")
    else:
        grid = (Bp // tm, Cp // tn)
        x_spec = pl.BlockSpec((tm, Hp), lambda i, j: (i, 0))
        w_spec = pl.BlockSpec((Hp, tn), lambda i, j: (0, j))
        row_spec = pl.BlockSpec((1, tn), lambda i, j: (0, j))
        out_spec = pl.BlockSpec((tm, tn), lambda i, j: (i, j))
        scratch = []
        semantics = ("parallel", "parallel")

    in_specs = [x_spec, w_spec]
    inputs = [x, wp]
    if quantized:
        in_specs.append(row_spec)
        inputs.append(sp)
    in_specs.append(row_spec)
    inputs.append(bp)

    out = pl.pallas_call(
        kernel,
        out_shape=jax.ShapeDtypeStruct((Bp, Cp), out_dtype),
        grid_spec=pltpu.PrefetchScalarGridSpec(
            num_scalar_prefetch=0,
            grid=grid,
            in_specs=in_specs,
            out_specs=out_spec,
            scratch_shapes=scratch,
        ),
        compiler_params=pltpu.CompilerParams(
            dimension_semantics=semantics,
            vmem_limit_bytes=_VMEM_LIMIT_BYTES,
        ),
    )(*inputs)

    if (Bp, Cp) != (B, C):
        out = out[:B, :C]
    return out


if __name__ == "__main__":
    key = jax.random.PRNGKey(0)
    kx, kw, kb = jax.random.split(key, 3)

    batch, hidden, num_classes = 2, 32, 16

    x = jax.random.normal(kx, (batch, hidden), dtype=jnp.float32)
    # Deterministic synthetic parameters (the wrapped `model` is unspecified).
    w = jax.random.normal(kw, (hidden, num_classes), dtype=jnp.float32) * 0.02
    b = jax.random.normal(kb, (num_classes,), dtype=jnp.float32) * 0.01

    ref = x @ w + b

    # Default path: bf16 MXU operands, parameters prepared once off hot path.
    params_bf16 = prepare_logits_params(w, b)
    logits = model_logits(x, params_bf16)
    jax.block_until_ready(logits)
    assert logits.shape == (batch, num_classes)
    assert jnp.allclose(logits, ref, atol=2e-2, rtol=2e-2)

    # Strict f32 operand path.
    params_f32 = prepare_logits_params(w, b, mxu_dtype=None)
    logits_f32 = model_logits(x, params_f32)
    jax.block_until_ready(logits_f32)
    assert logits_f32.shape == (batch, num_classes)
    assert jnp.allclose(logits_f32, ref, atol=1e-5, rtol=1e-5)

    # int8-weight path: per-column scales applied in the epilogue; portable
    # across v5e/v6e/v7x since W is dequantized to bf16 before the MXU.
    params_int8 = prepare_logits_params(w, b, weight_quant="int8")
    logits_q = model_logits(x, params_int8)
    jax.block_until_ready(logits_q)
    assert logits_q.shape == (batch, num_classes)
    assert jnp.allclose(logits_q, ref, atol=3e-2, rtol=3e-2)

    print("KERNEL_OK")
</pallas_src>

<mosaic_0001>
module attributes {stable_mosaic.version = 11 : i64} {
  func.func @kernel(%arg0: i32, %arg1: i32, %arg2: memref<16x128xbf16, #tpu.memory_space<vmem>>, %arg3: memref<128x128xbf16, #tpu.memory_space<vmem>>, %arg4: memref<1x128xf32, #tpu.memory_space<vmem>>, %arg5: memref<16x128xf32, #tpu.memory_space<vmem>>) attributes {dimension_semantics = [#tpu.dimension_semantics<parallel>, #tpu.dimension_semantics<parallel>], iteration_bounds = array<i64: 1, 1>, scalar_prefetch = 0 : i64, scratch_operands = 0 : i64, tpu.core_type = #tpu.core_type<tc>, window_params = [{transform_indices = @transform_0, window_bounds = array<i64: 16, 128>}, {transform_indices = @transform_1, window_bounds = array<i64: 128, 128>}, {transform_indices = @transform_2, window_bounds = array<i64: 1, 128>}, {transform_indices = @transform_3, window_bounds = array<i64: 16, 128>}]} {
    %c0 = arith.constant 0 : index
    %c0_0 = arith.constant 0 : index
    %0 = vector.load %arg3[%c0, %c0_0] : memref<128x128xbf16, #tpu.memory_space<vmem>>, vector<128x128xbf16>
    %c0_1 = arith.constant 0 : index
    %c0_2 = arith.constant 0 : index
    %1 = vector.load %arg2[%c0_1, %c0_2] : memref<16x128xbf16, #tpu.memory_space<vmem>>, vector<16x128xbf16>
    %cst = arith.constant dense<0.000000e+00> : vector<16x128xf32>
    %2 = tpu.matmul %1, %0, %cst {dimension_numbers = #tpu.dot_dimension_numbers<[1], [0], [0], [1], [0, 0, 1, 1], [], []>} : vector<16x128xbf16>, vector<128x128xbf16>, vector<16x128xf32> -> vector<16x128xf32>
    %c0_3 = arith.constant 0 : index
    %c0_4 = arith.constant 0 : index
    %3 = vector.load %arg4[%c0_3, %c0_4] : memref<1x128xf32, #tpu.memory_space<vmem>>, vector<1x128xf32>
    %4 = vector.broadcast %3 : vector<1x128xf32> to vector<16x128xf32>
    %5 = arith.addf %2, %4 : vector<16x128xf32>
    %c0_5 = arith.constant 0 : index
    %c0_6 = arith.constant 0 : index
    %6 = vector.load %arg5[%c0_5, %c0_6] : memref<16x128xf32, #tpu.memory_space<vmem>>, vector<16x128xf32>
    tpu.vector_store %arg5[%c0_5, %c0_6], %5 {strides = array<i32>} : memref<16x128xf32, #tpu.memory_space<vmem>>, vector<16x128xf32>,
    return
  }
  func.func @transform_0(%arg0: i32, %arg1: i32) -> (i32, i32) {
    %c0_i32 = arith.constant 0 : i32
    %c0_i32_0 = arith.constant 0 : i32
    return %arg0, %c0_i32 : i32, i32
  }
  func.func @transform_1(%arg0: i32, %arg1: i32) -> (i32, i32) {
    %c0_i32 = arith.constant 0 : i32
    %c0_i32_0 = arith.constant 0 : i32
    return %c0_i32, %arg1 : i32, i32
  }
  func.func @transform_2(%arg0: i32, %arg1: i32) -> (i32, i32) {
    %c0_i32 = arith.constant 0 : i32
    %c0_i32_0 = arith.constant 0 : i32
    return %c0_i32, %arg1 : i32, i32
  }
  func.func @transform_3(%arg0: i32, %arg1: i32) -> (i32, i32) {
    %c0_i32 = arith.constant 0 : i32
    return %arg0, %arg1 : i32, i32
  }
}

</mosaic_0001>

<llo_original>
// kernel: tpu_custom_call.1
$region0: #{tpu_custom_call.1}
  #allocation0 [shape = 'u32[]', space=smem, size = 0x4, offset = 0x4, fixed_abs, tag = 'smem constant byte address 0x4 - core index']
  #allocation1 [shape = 'u32[144,128]{1,0:T(1,128)}', space=vmem, size = 0x12000, scoped, tag = 'internal scratch']
  %s0 = inlined_call_operand.hbm [shape: bf16[16,128], index: 0, kind: input, shape index: {}]
  %s1 = inlined_call_operand.hbm [shape: bf16[128,128], index: 1, kind: input, shape index: {}]
  %s2 = inlined_call_operand.vmem [shape: f32[1,128], index: 2, kind: input, shape index: {}]
  %s3 = inlined_call_operand.hbm [shape: f32[16,128], index: 3, kind: output, shape index: {}]
  %s4 = sld [smem:[#allocation0]]
  $region30: #{tpu_custom_call.1} parent=0
    _
  %s6 = ssub.s32 1, %s4
  %s7 = scalar_select 0, %s6, %s4
  $region1: #{tpu_custom_call.1} parent=0
    #allocation2 [shape = 'u8[4096]{0}', space=vmem, size = 0x1000, scoped, tag = 'input window, operand 0, single buffered']
    #allocation3 [shape = 's32[1]{0}', space=sflag, size = 0x4, scoped, tag = 'scoped memory for tpu_custom_call.1']
    #allocation4 [shape = 's32[1]{0}', space=sflag, size = 0x4, scoped, tag = 'scoped memory for tpu_custom_call.1']
    #allocation5 [shape = 'u8[32768]{0}', space=vmem, size = 0x8000, scoped, tag = 'input window, operand 1, single buffered']
    #allocation6 [shape = 's32[1]{0}', space=sflag, size = 0x4, scoped, tag = 'scoped memory for tpu_custom_call.1']
    #allocation7 [shape = 'u8[8192]{0}', space=vmem, size = 0x2000, scoped, tag = 'output window, operand 0, single buffered']
    %8 = vsyncpa [#allocation3], 0
    %9 = vsyncpa [#allocation6], 0
    %10 = vsyncpa [#allocation4], 0
    // Predicated region
    $region2: #{tpu_custom_call.1} parent=1 // pred_check
      _
    $region3: #{tpu_custom_call.1} parent=1 // pred_check_branch
      %12 = sbr.rel (0) target = $region5
    $region4: #{tpu_custom_call.1} parent=1 // pred_region
      %s14 = ssub.s32 128, 128
      %15 = vsyncadd [#allocation3], %s14
      %s16 = sshll.u32 [#allocation2], 4
      %s17 = int_to_ptr.vmem [resolvable:$true] %s16
      %22 = dma.hbm_to_vmem [thread:$0]  %s0, 128, %s17, [#allocation3], 64, 64, 4
    $region5: #{tpu_custom_call.1} parent=1 // pred_fallthru
      _
    // Predicated region
    $region6: #{tpu_custom_call.1} parent=1 // pred_check
      _
    $region7: #{tpu_custom_call.1} parent=1 // pred_check_branch
      %24 = sbr.rel (0) target = $region9
    $region8: #{tpu_custom_call.1} parent=1 // pred_region
      %s26 = ssub.s32 1024, 1024
      %27 = vsyncadd [#allocation6], %s26
      %s28 = sshll.u32 [#allocation5], 4
      %s29 = int_to_ptr.vmem [resolvable:$true] %s28
      %34 = dma.hbm_to_vmem [thread:$0]  %s1, 1024, %s29, [#allocation6], 64, 64, 4
    $region9: #{tpu_custom_call.1} parent=1 // pred_fallthru
      _
    // Predicated region
    $region10: #{tpu_custom_call.1} parent=1 // pred_check
      _
    $region11: #{tpu_custom_call.1} parent=1 // pred_check_branch
      %36 = sbr.rel (0) target = $region13
    $region12: #{tpu_custom_call.1} parent=1 // pred_region
      _
    $region13: #{tpu_custom_call.1} parent=1 // pred_fallthru
      _
    // Predicated region
    $region14: #{tpu_custom_call.1} parent=1 // pred_check
      _
    $region15: #{tpu_custom_call.1} parent=1 // pred_check_branch
      %38 = sbr.rel (0) target = $region17
    $region16: #{tpu_custom_call.1} parent=1 // pred_region
      %39 = dma.done [#allocation3], 128
    $region17: #{tpu_custom_call.1} parent=1 // pred_fallthru
      _
    // Predicated region
    $region18: #{tpu_custom_call.1} parent=1 // pred_check
      _
    $region19: #{tpu_custom_call.1} parent=1 // pred_check_branch
      %41 = sbr.rel (0) target = $region21
    $region20: #{tpu_custom_call.1} parent=1 // pred_region
      %42 = dma.done [#allocation6], 1024
    $region21: #{tpu_custom_call.1} parent=1 // pred_fallthru
      _
    %v44 = vld [vmem:[#allocation5] sm:$0xf]
    %v45 = vld [vmem:[#allocation5 + $0x4] sm:$0xf]
    %v46 = vld [vmem:[#allocation5 + $0x8] sm:$0xf]
    %v47 = vld [vmem:[#allocation5 + $0xc] sm:$0xf]
    %v48 = vld [vmem:[#allocation5 + $0x10] sm:$0xf]
    %v49 = vld [vmem:[#allocation5 + $0x14] sm:$0xf]
    %v50 = vld [vmem:[#allocation5 + $0x18] sm:$0xf]
    %v51 = vld [vmem:[#allocation5 + $0x1c] sm:$0xf]
    %v52 = vld [vmem:[#allocation5 + $0x20] sm:$0xf]
    %v53 = vld [vmem:[#allocation5 + $0x24] sm:$0xf]
    %v54 = vld [vmem:[#allocation5 + $0x28] sm:$0xf]
    %v55 = vld [vmem:[#allocation5 + $0x2c] sm:$0xf]
    %v56 = vld [vmem:[#allocation5 + $0x30] sm:$0xf]
    %v57 = vld [vmem:[#allocation5 + $0x34] sm:$0xf]
    %v58 = vld [vmem:[#allocation5 + $0x38] sm:$0xf]
    %v59 = vld [vmem:[#allocation5 + $0x3c] sm:$0xf]
    %v60 = vld [vmem:[#allocation2] sm:$0xf]
    %v61 = vld [vmem:[#allocation2 + $0x4] sm:$0xf]
    %v62 = vld [vmem:[%s2] sm:$0x1]
    %v64 = vlaneseq
    %v65 = vshrl.u32 %v64, 7
    %v66 = vsub.s32 0, %v65
    %v67 = vrot.slane %v62, %v66
    %v71 = vunpack.c.l.b16 %v60
    %v72 = vunpack.c.l.b16 %v61
    %v73 = vpack.c.b16 %v72, %v71
    %v91 = vunpack.c.l.b16 %v44
    %v92 = vunpack.c.l.b16 %v45
    %v93 = vunpack.c.l.b16 %v46
    %v94 = vunpack.c.l.b16 %v47
    %v95 = vunpack.c.l.b16 %v48
    %v96 = vunpack.c.l.b16 %v49
    %v97 = vunpack.c.l.b16 %v50
    %v98 = vunpack.c.l.b16 %v51
    %v99 = vunpack.c.l.b16 %v52
    %v100 = vunpack.c.l.b16 %v53
    %v101 = vunpack.c.l.b16 %v54
    %v102 = vunpack.c.l.b16 %v55
    %v103 = vunpack.c.l.b16 %v56
    %v104 = vunpack.c.l.b16 %v57
    %v105 = vunpack.c.l.b16 %v58
    %v106 = vunpack.c.l.b16 %v59
    %v107 = vpack.c.b16 %v92, %v91
    %v108 = vpack.c.b16 %v94, %v93
    %v109 = vpack.c.b16 %v96, %v95
    %v110 = vpack.c.b16 %v98, %v97
    %v111 = vpack.c.b16 %v100, %v99
    %v112 = vpack.c.b16 %v102, %v101
    %v113 = vpack.c.b16 %v104, %v103
    %v114 = vpack.c.b16 %v106, %v105
    %123 = vmatprep.subr.bf16.mxu0 0
    %124 = vmatpush1.bf16.msra.mxu0 %v107
    %125 = vmatprep.subr.bf16.mxu0 0
    %126 = vmatpush1.bf16.msra.mxu0 %v108
    %127 = vmatprep.subr.bf16.mxu0 0
    %128 = vmatpush1.bf16.msra.mxu0 %v109
    %129 = vmatprep.subr.bf16.mxu0 0
    %130 = vmatpush1.bf16.msra.mxu0 %v110
    %131 = vmatprep.subr.bf16.mxu0 0
    %132 = vmatpush1.bf16.msra.mxu0 %v111
    %133 = vmatprep.subr.bf16.mxu0 0
    %134 = vmatpush1.bf16.msra.mxu0 %v112
    %135 = vmatprep.subr.bf16.mxu0 0
    %136 = vmatpush1.bf16.msra.mxu0 %v113
    %137 = vmatprep.subr.bf16.mxu0 0
    %138 = vmatpush1.bf16.msra.mxu0 %v114
    %139 = vmatprep.subr.bf16.mxu0 0
    %140 = vmatpush1.bf16.msra.mxu0 0
    %141 = vmatprep.subr.bf16.mxu0 0
    %142 = vmatpush1.bf16.msra.mxu0 0
    %143 = vmatprep.subr.bf16.mxu0 0
    %144 = vmatpush1.bf16.msra.mxu0 0
    %145 = vmatprep.subr.bf16.mxu0 0
    %146 = vmatpush1.bf16.msra.mxu0 0
    %147 = vmatprep.subr.bf16.mxu0 0
    %148 = vmatpush1.bf16.msra.mxu0 0
    %149 = vmatprep.subr.bf16.mxu0 0
    %150 = vmatpush1.bf16.msra.mxu0 0
    %151 = vmatprep.subr.bf16.mxu0 0
    %152 = vmatpush1.bf16.msra.mxu0 0
    %153 = vmatprep.subr.bf16.mxu0 0
    %154 = vmatpush1.bf16.msra.mxu0 0
    %155 = vmatprep.mubr.bf16.mxu0 0
    %156 = vmatmul.mubr.bf16.gmra.mrb[0].mxu0 %v73
    %v157 = vpop.f32.mrb[0].mxu0
    %v158 = vadd.f32 %v67, %v157
    %v159 = vpop.f32.mrb[0].mxu0
    %v160 = vpop.f32.mrb[0].mxu0
    %v161 = vadd.f32 %v67, %v160
    %v162 = vpop.f32.mrb[0].mxu0
    %163 = vdwg.mxu0
    %164 = vst [vmem:[#allocation7] sm:$0xff] %v158
    %165 = vst [vmem:[#allocation7 + $0x8] sm:$0xff] %v161
    // Predicated region
    $region22: #{tpu_custom_call.1} parent=1 // pred_check
      _
    $region23: #{tpu_custom_call.1} parent=1 // pred_check_branch
      %167 = sbr.rel (0) target = $region25
    $region24: #{tpu_custom_call.1} parent=1 // pred_region
      %s169 = ssub.s32 256, 256
      %170 = vsyncadd [#allocation4], %s169
      %s171 = sshll.u32 [#allocation7], 4
      %s172 = int_to_ptr.vmem [resolvable:$true] %s171
      %177 = dma.vmem_to_hbm [thread:$0]  %s172, 256, %s3, [#allocation4], 128, 128, 8
    $region25: #{tpu_custom_call.1} parent=1 // pred_fallthru
      _
    // Predicated region
    $region26: #{tpu_custom_call.1} parent=1 // pred_check
      _
    $region27: #{tpu_custom_call.1} parent=1 // pred_check_branch
      %179 = sbr.rel (0) target = $region29
    $region28: #{tpu_custom_call.1} parent=1 // pred_region
      %180 = dma.done [#allocation4], 256
    $region29: #{tpu_custom_call.1} parent=1 // pred_fallthru
      _
    %181 = vsyncpa [#allocation3], 1
    %182 = vsyncpa [#allocation6], 1
    %183 = vsyncpa [#allocation4], 1

</llo_original>
